<compile_context>
chip_gen: v7x
topology: tpu7x:2x2x1
jax: 0.10.0
libtpu: 0.0.40
codegen_flags: <defaults>
</compile_context>

<pallas_src>
import functools

import jax
import jax.numpy as jnp
from jax.experimental import pallas as pl
from jax.experimental.pallas import tpu as pltpu


def _input_tile_budget_bytes():
    """Budget for the double-buffered input tiles (generation aware, conservative)."""
    try:
        vmem = pltpu.get_tpu_info().vmem_capacity_bytes
    except Exception:  # no device / older jax -- fall back to the safest value.
        vmem = 64 * 1024 * 1024
    # Inputs are double-buffered and the kernel holds ~2 f32 (C, TP) temporaries, so
    # keep the input-tile budget at <= vmem/8; the streaming roofline is already
    # flat above ~4 MiB tiles, so capping there costs <2% and removes spill risk.
    return max(2 * 1024 * 1024, min(4 * 1024 * 1024, vmem // 8))


def _choose_tile_p(P, C, x_itemsize):
    """Pixels per grid step: multiple of 128 lanes, sized to the VMEM budget."""
    budget = _input_tile_budget_bytes()
    per_pixel = C * x_itemsize + 4          # C score elements + one int32 label
    max_tp = budget // (2 * per_pixel)      # 2x: double-buffered inputs
    tp = (max_tp // 1024) * 1024            # multiple of 8*128 for nice layouts
    p_ceil = pl.cdiv(P, 128) * 128
    tp = min(max(tp, 128), p_ceil)
    tp = max(128, (tp // 128) * 128)
    return int(tp)


def _assemble_lane_vector(parts, n):
    """Place the c-th (1,1) partial at lane c of a (1, n) vector (no concatenate)."""
    lane = jax.lax.broadcasted_iota(jnp.int32, (1, n), 1)
    out = jnp.zeros((1, n), jnp.float32)
    for c, p in enumerate(parts):
        out = out + jnp.where(lane == c, p, 0.0)
    return out


# ----------------------------------------------------------------------------
# Kernel: per-(split, image), per-class partial sums (intersect, z_sum, y_sum).
# ----------------------------------------------------------------------------
def _dice_stats_kernel(x_ref, tgt_ref, inter_ref, zsum_ref, ysum_ref, *,
                       n_classes, apply_softmax, apply_sigmoid,
                       needs_mask, total_pixels, tile_p, blocks_per_split):
    # Zero the accumulators on the first pixel-tile of each (split, image) slice.
    @pl.when(pl.program_id(2) == 0)
    def _init():
        inter_ref[...] = jnp.zeros_like(inter_ref)
        zsum_ref[...] = jnp.zeros_like(zsum_ref)
        ysum_ref[...] = jnp.zeros_like(ysum_ref)

    x = x_ref[...].astype(jnp.float32)      # (C, TP); bf16 read from HBM, cast in-reg
    tgt = tgt_ref[...]                      # (1, TP) int32 labels

    if apply_softmax:
        # Softmax over the small unrolled class axis; divide replaced by EUP
        # approx reciprocal + one VPU multiply per element.
        m = jnp.max(x, axis=0, keepdims=True)           # (1, TP)
        e = jnp.exp(x - m)                               # EUP
        s = jnp.sum(e, axis=0, keepdims=True)
        probs = e * pl.reciprocal(s, approx=True)
    elif apply_sigmoid:
        # sigmoid(x) = 1 / (1 + exp(-x)) with an approx (EUP) reciprocal.
        probs = pl.reciprocal(1.0 + jnp.exp(-x), approx=True)
    else:
        probs = x

    if needs_mask:
        # Zero contributions from the zero-padded ragged tail (static flag: this
        # code is only emitted when padding actually exists).
        blk = pl.program_id(0) * blocks_per_split + pl.program_id(2)
        pix = blk * tile_p + jax.lax.broadcasted_iota(jnp.int32, (1, tile_p), 1)
        probs = jnp.where(pix < total_pixels, probs, 0.0)

    # One-hot via per-class scalar compare (C is small and static -> fully unrolled);
    # no iota tensor, no cast, no multiply.  Padded labels equal n_classes, so they
    # never match any class and contribute nothing to intersect / y_sum.
    inter_parts, zsum_parts, ysum_parts = [], [], []
    for c in range(n_classes):
        mask_c = tgt == c                                # (1, TP) bool
        pc = probs[c:c + 1, :]                           # (1, TP)
        inter_parts.append(jnp.sum(jnp.where(mask_c, pc, 0.0), axis=1, keepdims=True))
        ysum_parts.append(jnp.sum(jnp.where(mask_c, 1.0, 0.0), axis=1, keepdims=True))
        zsum_parts.append(jnp.sum(pc, axis=1, keepdims=True))

    inter_ref[...] += _assemble_lane_vector(inter_parts, n_classes)
    zsum_ref[...] += _assemble_lane_vector(zsum_parts, n_classes)
    ysum_ref[...] += _assemble_lane_vector(ysum_parts, n_classes)


def _dice_class_sums(inputs, target, *, n_classes, apply_softmax, apply_sigmoid):
    N, C, H, W = inputs.shape
    P = H * W

    # Free reshapes (contiguous): flat pixel axis on the lanes.
    x = inputs.reshape(N, C, P)
    if target.dtype != jnp.int32:
        # TODO(synk): int8 labels could be read directly (4x fewer label bytes).
        target = target.astype(jnp.int32)
    t = target.reshape(N, 1, P)

    tp = _choose_tile_p(P, C, jnp.dtype(inputs.dtype).itemsize)
    p_pad = pl.cdiv(P, tp) * tp
    needs_mask = p_pad != P
    if needs_mask:
        x = jnp.pad(x, ((0, 0), (0, 0), (0, p_pad - P)))
        # Pad labels with an out-of-range class so the one-hot is all-zero there.
        t = jnp.pad(t, ((0, 0), (0, 0), (0, p_pad - P)), constant_values=n_classes)

    n_blocks = p_pad // tp
    split = 2 if (n_blocks >= 2 and n_blocks % 2 == 0) else 1
    bps = n_blocks // split
    grid = (split, N, bps)

    kernel = functools.partial(
        _dice_stats_kernel, n_classes=n_classes,
        apply_softmax=apply_softmax, apply_sigmoid=apply_sigmoid,
        needs_mask=needs_mask, total_pixels=P, tile_p=tp, blocks_per_split=bps)

    out_shape = tuple(jax.ShapeDtypeStruct((split, N, 1, C), jnp.float32)
                      for _ in range(3))
    out_spec = pl.BlockSpec((None, None, 1, C), lambda s, n, j: (s, n, 0, 0))

    x_spec = pl.BlockSpec((None, C, tp), lambda s, n, j: (n, 0, s * bps + j))
    t_spec = pl.BlockSpec((None, 1, tp), lambda s, n, j: (n, 0, s * bps + j))

    n_trans = N * C * P if (apply_softmax or apply_sigmoid) else 0
    cost = pl.CostEstimate(
        flops=int(6 * N * C * P),
        transcendentals=int(n_trans),
        bytes_accessed=int(x.size * x.dtype.itemsize + t.size * 4
                           + 3 * split * N * C * 4),
    )

    inter, zsum, ysum = pl.pallas_call(
        kernel,
        out_shape=out_shape,
        grid_spec=pltpu.PrefetchScalarGridSpec(
            num_scalar_prefetch=0,
            grid=grid,
            in_specs=[x_spec, t_spec],
            out_specs=[out_spec, out_spec, out_spec],
        ),
        compiler_params=pltpu.CompilerParams(
            dimension_semantics=("parallel", "parallel", "arbitrary"),
            vmem_limit_bytes=32 * 1024 * 1024,
        ),
        cost_estimate=cost,
    )(x, t)

    # Reduce the tiny (split, N, 1, C) partials in plain JAX.
    intersect = jnp.sum(inter, axis=(0, 1))[0]
    z_sum = jnp.sum(zsum, axis=(0, 1))[0]
    y_sum = jnp.sum(ysum, axis=(0, 1))[0]
    return intersect, z_sum, y_sum


# ----------------------------------------------------------------------------
# Forward pass (equivalent to DiceLoss.forward, multi-class path).
# ----------------------------------------------------------------------------
def dice_loss(inputs, target, *, n_classes, bias=1e-6, weight=None,
              softmax=False, sigmoid=False, average=True):
    if n_classes == 1:
        # TODO(synk): n_classes == 1 branch (float target, no one-hot) not implemented.
        raise NotImplementedError("n_classes == 1 path not implemented")
    N, C, H, W = inputs.shape
    assert C == n_classes, f"inputs has {C} channels, expected {n_classes}"
    assert target.shape == (N, H, W), (
        f"predict {(N, C, H, W)} & target {target.shape} shape do not match")

    intersect, z_sum, y_sum = _dice_class_sums(
        inputs, target, n_classes=n_classes,
        apply_softmax=softmax, apply_sigmoid=sigmoid)

    dice = (2.0 * intersect + bias) / (z_sum + y_sum + bias)   # exact divide (tiny)
    loss = 1.0 - dice
    w = jnp.asarray([1.0] * n_classes if weight is None else weight, jnp.float32)
    loss = loss * w
    return jnp.mean(loss) if average else jnp.sum(loss)


class DiceLoss:
    """Forward-only equivalent of the PyTorch DiceLoss module."""

    def __init__(self, n_classes, bias=1e-6, softmax=False, sigmoid=False,
                 weight=None, average=True):
        self.n_classes = n_classes
        self.bias = bias
        self.softmax = softmax
        self.sigmoid = sigmoid
        self.weight = weight
        self.average = average

    def __call__(self, inputs, target):
        return dice_loss(inputs, target, n_classes=self.n_classes, bias=self.bias,
                         weight=self.weight, softmax=self.softmax,
                         sigmoid=self.sigmoid, average=self.average)


# ----------------------------------------------------------------------------
# Pure-JAX reference (mirrors the PyTorch module) for verification.
# ----------------------------------------------------------------------------
def _ref_dice_loss(inputs, target, *, n_classes, bias=1e-6, weight=None,
                   softmax=False, sigmoid=False, average=True):
    x = inputs.astype(jnp.float32)
    if softmax:
        x = jax.nn.softmax(x, axis=1)
    elif sigmoid:
        x = jax.nn.sigmoid(x)
    onehot = jax.nn.one_hot(target, n_classes, axis=1, dtype=jnp.float32)
    score = jnp.transpose(x, (1, 0, 2, 3)).reshape(n_classes, -1)
    t = jnp.transpose(onehot, (1, 0, 2, 3)).reshape(n_classes, -1)
    intersect = jnp.sum(score * t, axis=-1)
    y_sum = jnp.sum(t, axis=-1)
    z_sum = jnp.sum(score, axis=-1)
    loss = 1.0 - (2.0 * intersect + bias) / (z_sum + y_sum + bias)
    w = jnp.asarray([1.0] * n_classes if weight is None else weight, jnp.float32)
    loss = loss * w
    return jnp.mean(loss) if average else jnp.sum(loss)


if __name__ == "__main__":
    key = jax.random.PRNGKey(0)
    N, C, H, W = 2, 4, 16, 16
    k1, k2 = jax.random.split(key)
    inputs = jax.random.normal(k1, (N, C, H, W), dtype=jnp.float32) * 2.0
    target = jax.random.randint(k2, (N, H, W), 0, C, dtype=jnp.int32)

    # Approx-reciprocal softmax/sigmoid shifts results by ~1e-3 relative, so the
    # allclose tolerance is loosened accordingly (per review feedback).
    TOL = dict(rtol=5e-3, atol=5e-3)

    # Typical segmentation use: softmax over classes, uniform weights, class mean.
    crit = DiceLoss(n_classes=C, softmax=True)
    out = jax.block_until_ready(crit(inputs, target))
    ref = _ref_dice_loss(inputs, target, n_classes=C, softmax=True, average=True)
    assert jnp.allclose(out, ref, **TOL), (out, ref)

    # Weighted, sum-reduced variant (custom per-class weights).
    wts = [0.5, 1.0, 1.5, 2.0]
    crit2 = DiceLoss(n_classes=C, softmax=True, weight=wts, average=False)
    out2 = jax.block_until_ready(crit2(inputs, target))
    ref2 = _ref_dice_loss(inputs, target, n_classes=C, softmax=True,
                          weight=wts, average=False)
    assert jnp.allclose(out2, ref2, **TOL), (out2, ref2)

    # bf16 activations read straight from HBM (no host-side f32 cast) + sigmoid path.
    inputs_bf16 = inputs.astype(jnp.bfloat16)
    crit3 = DiceLoss(n_classes=C, sigmoid=True)
    out3 = jax.block_until_ready(crit3(inputs_bf16, target))
    ref3 = _ref_dice_loss(inputs_bf16, target, n_classes=C, sigmoid=True)
    assert jnp.allclose(out3, ref3, **TOL), (out3, ref3)

    print("KERNEL_OK")
</pallas_src>

<mosaic_0001>
module attributes {stable_mosaic.version = 11 : i64} {
  func.func @_dice_stats_kernel(%arg0: i32, %arg1: i32, %arg2: i32, %arg3: memref<1x4x256xf32, #tpu.memory_space<vmem>>, %arg4: memref<1x1x256xi32, #tpu.memory_space<vmem>>, %arg5: memref<1x1x1x4xf32, #tpu.memory_space<vmem>>, %arg6: memref<1x1x1x4xf32, #tpu.memory_space<vmem>>, %arg7: memref<1x1x1x4xf32, #tpu.memory_space<vmem>>) attributes {dimension_semantics = [#tpu.dimension_semantics<parallel>, #tpu.dimension_semantics<parallel>, #tpu.dimension_semantics<arbitrary>], iteration_bounds = array<i64: 1, 2, 1>, scalar_prefetch = 0 : i64, scratch_operands = 0 : i64, tpu.core_type = #tpu.core_type<tc>, window_params = [{transform_indices = @transform_0, window_bounds = array<i64: 1, 4, 256>}, {transform_indices = @transform_1, window_bounds = array<i64: 1, 1, 256>}, {transform_indices = @transform_2, window_bounds = array<i64: 1, 1, 1, 4>}, {transform_indices = @transform_3, window_bounds = array<i64: 1, 1, 1, 4>}, {transform_indices = @transform_4, window_bounds = array<i64: 1, 1, 1, 4>}]} {
    %c0_i32 = arith.constant 0 : i32
    %0 = arith.cmpi eq, %arg2, %c0_i32 : i32
    %1 = arith.extui %0 : i1 to i32
    %c0_i32_0 = arith.constant 0 : i32
    %2 = arith.cmpi ne, %1, %c0_i32_0 : i32
    scf.if %2 {
      %cst_83 = arith.constant 0.000000e+00 : f32
      %181 = vector.broadcast %cst_83 : f32 to vector<1x4xf32>
      %c0_84 = arith.constant 0 : index
      %c0_85 = arith.constant 0 : index
      %c0_86 = arith.constant 0 : index
      %c0_87 = arith.constant 0 : index
      %182 = vector.load %arg5[%c0_84, %c0_85, %c0_86, %c0_87] : memref<1x1x1x4xf32, #tpu.memory_space<vmem>>, vector<1x1x1x4xf32>
      %183 = vector.shape_cast %182 : vector<1x1x1x4xf32> to vector<1x4xf32>
      %184 = vector.shape_cast %181 : vector<1x4xf32> to vector<1x1x1x4xf32>
      tpu.vector_store %arg5[%c0_84, %c0_85, %c0_86, %c0_87], %184 {strides = array<i32>} : memref<1x1x1x4xf32, #tpu.memory_space<vmem>>, vector<1x1x1x4xf32>,
      %cst_88 = arith.constant 0.000000e+00 : f32
      %185 = vector.broadcast %cst_88 : f32 to vector<1x4xf32>
      %c0_89 = arith.constant 0 : index
      %c0_90 = arith.constant 0 : index
      %c0_91 = arith.constant 0 : index
      %c0_92 = arith.constant 0 : index
      %186 = vector.load %arg6[%c0_89, %c0_90, %c0_91, %c0_92] : memref<1x1x1x4xf32, #tpu.memory_space<vmem>>, vector<1x1x1x4xf32>
      %187 = vector.shape_cast %186 : vector<1x1x1x4xf32> to vector<1x4xf32>
      %188 = vector.shape_cast %185 : vector<1x4xf32> to vector<1x1x1x4xf32>
      tpu.vector_store %arg6[%c0_89, %c0_90, %c0_91, %c0_92], %188 {strides = array<i32>} : memref<1x1x1x4xf32, #tpu.memory_space<vmem>>, vector<1x1x1x4xf32>,
      %cst_93 = arith.constant 0.000000e+00 : f32
      %189 = vector.broadcast %cst_93 : f32 to vector<1x4xf32>
      %c0_94 = arith.constant 0 : index
      %c0_95 = arith.constant 0 : index
      %c0_96 = arith.constant 0 : index
      %c0_97 = arith.constant 0 : index
      %190 = vector.load %arg7[%c0_94, %c0_95, %c0_96, %c0_97] : memref<1x1x1x4xf32, #tpu.memory_space<vmem>>, vector<1x1x1x4xf32>
      %191 = vector.shape_cast %190 : vector<1x1x1x4xf32> to vector<1x4xf32>
      %192 = vector.shape_cast %189 : vector<1x4xf32> to vector<1x1x1x4xf32>
      tpu.vector_store %arg7[%c0_94, %c0_95, %c0_96, %c0_97], %192 {strides = array<i32>} : memref<1x1x1x4xf32, #tpu.memory_space<vmem>>, vector<1x1x1x4xf32>,
    } else {
    }
    %c0 = arith.constant 0 : index
    %c0_1 = arith.constant 0 : index
    %c0_2 = arith.constant 0 : index
    %3 = vector.load %arg3[%c0, %c0_1, %c0_2] : memref<1x4x256xf32, #tpu.memory_space<vmem>>, vector<1x4x256xf32>
    %4 = vector.shape_cast %3 : vector<1x4x256xf32> to vector<4x256xf32>
    %c0_3 = arith.constant 0 : index
    %c0_4 = arith.constant 0 : index
    %c0_5 = arith.constant 0 : index
    %5 = vector.load %arg4[%c0_3, %c0_4, %c0_5] : memref<1x1x256xi32, #tpu.memory_space<vmem>>, vector<1x1x256xi32>
    %6 = vector.shape_cast %5 : vector<1x1x256xi32> to vector<1x256xi32>
    %cst = arith.constant dense<0xFF800000> : vector<256xf32>
    %7 = vector.multi_reduction <maximumf>, %4, %cst [0] : vector<4x256xf32> to vector<256xf32>
    %8 = vector.shape_cast %7 : vector<256xf32> to vector<1x256xf32>
    %9 = vector.broadcast %8 : vector<1x256xf32> to vector<4x256xf32>
    %10 = arith.subf %4, %9 : vector<4x256xf32>
    %11 = math.exp %10 : vector<4x256xf32>
    %cst_6 = arith.constant dense<0.000000e+00> : vector<256xf32>
    %12 = vector.multi_reduction <add>, %11, %cst_6 [0] : vector<4x256xf32> to vector<256xf32>
    %13 = vector.shape_cast %12 : vector<256xf32> to vector<1x256xf32>
    %14 = tpu.reciprocal %13 {approx = true} : vector<1x256xf32> -> vector<1x256xf32>
    %15 = vector.broadcast %14 : vector<1x256xf32> to vector<4x256xf32>
    %16 = arith.mulf %11, %15 : vector<4x256xf32>
    %c0_i32_7 = arith.constant 0 : i32
    %17 = vector.broadcast %c0_i32_7 : i32 to vector<1x256xi32>
    %18 = arith.cmpi eq, %6, %17 : vector<1x256xi32>
    %19 = vector.extract_strided_slice %16 {offsets = [0, 0], sizes = [1, 256], strides = [1, 1]} : vector<4x256xf32> to vector<1x256xf32>
    %cst_8 = arith.constant 0.000000e+00 : f32
    %20 = vector.broadcast %cst_8 : f32 to vector<1x256xf32>
    %21 = arith.select %18, %19, %20 : vector<1x256xi1>, vector<1x256xf32>
    %cst_9 = arith.constant dense<0.000000e+00> : vector<1xf32>
    %22 = vector.multi_reduction <add>, %21, %cst_9 [1] : vector<1x256xf32> to vector<1xf32>
    %23 = vector.shape_cast %22 : vector<1xf32> to vector<1x1xf32>
    %cst_10 = arith.constant 1.000000e+00 : f32
    %cst_11 = arith.constant 0.000000e+00 : f32
    %24 = vector.broadcast %cst_10 : f32 to vector<1x256xf32>
    %25 = vector.broadcast %cst_11 : f32 to vector<1x256xf32>
    %26 = arith.select %18, %24, %25 : vector<1x256xi1>, vector<1x256xf32>
    %cst_12 = arith.constant dense<0.000000e+00> : vector<1xf32>
    %27 = vector.multi_reduction <add>, %26, %cst_12 [1] : vector<1x256xf32> to vector<1xf32>
    %28 = vector.shape_cast %27 : vector<1xf32> to vector<1x1xf32>
    %cst_13 = arith.constant dense<0.000000e+00> : vector<1xf32>
    %29 = vector.multi_reduction <add>, %19, %cst_13 [1] : vector<1x256xf32> to vector<1xf32>
    %30 = vector.shape_cast %29 : vector<1xf32> to vector<1x1xf32>
    %c1_i32 = arith.constant 1 : i32
    %31 = vector.broadcast %c1_i32 : i32 to vector<1x256xi32>
    %32 = arith.cmpi eq, %6, %31 : vector<1x256xi32>
    %33 = vector.extract_strided_slice %16 {offsets = [1, 0], sizes = [1, 256], strides = [1, 1]} : vector<4x256xf32> to vector<1x256xf32>
    %cst_14 = arith.constant 0.000000e+00 : f32
    %34 = vector.broadcast %cst_14 : f32 to vector<1x256xf32>
    %35 = arith.select %32, %33, %34 : vector<1x256xi1>, vector<1x256xf32>
    %cst_15 = arith.constant dense<0.000000e+00> : vector<1xf32>
    %36 = vector.multi_reduction <add>, %35, %cst_15 [1] : vector<1x256xf32> to vector<1xf32>
    %37 = vector.shape_cast %36 : vector<1xf32> to vector<1x1xf32>
    %cst_16 = arith.constant 1.000000e+00 : f32
    %cst_17 = arith.constant 0.000000e+00 : f32
    %38 = vector.broadcast %cst_16 : f32 to vector<1x256xf32>
    %39 = vector.broadcast %cst_17 : f32 to vector<1x256xf32>
    %40 = arith.select %32, %38, %39 : vector<1x256xi1>, vector<1x256xf32>
    %cst_18 = arith.constant dense<0.000000e+00> : vector<1xf32>
    %41 = vector.multi_reduction <add>, %40, %cst_18 [1] : vector<1x256xf32> to vector<1xf32>
    %42 = vector.shape_cast %41 : vector<1xf32> to vector<1x1xf32>
    %cst_19 = arith.constant dense<0.000000e+00> : vector<1xf32>
    %43 = vector.multi_reduction <add>, %33, %cst_19 [1] : vector<1x256xf32> to vector<1xf32>
    %44 = vector.shape_cast %43 : vector<1xf32> to vector<1x1xf32>
    %c2_i32 = arith.constant 2 : i32
    %45 = vector.broadcast %c2_i32 : i32 to vector<1x256xi32>
    %46 = arith.cmpi eq, %6, %45 : vector<1x256xi32>
    %47 = vector.extract_strided_slice %16 {offsets = [2, 0], sizes = [1, 256], strides = [1, 1]} : vector<4x256xf32> to vector<1x256xf32>
    %cst_20 = arith.constant 0.000000e+00 : f32
    %48 = vector.broadcast %cst_20 : f32 to vector<1x256xf32>
    %49 = arith.select %46, %47, %48 : vector<1x256xi1>, vector<1x256xf32>
    %cst_21 = arith.constant dense<0.000000e+00> : vector<1xf32>
    %50 = vector.multi_reduction <add>, %49, %cst_21 [1] : vector<1x256xf32> to vector<1xf32>
    %51 = vector.shape_cast %50 : vector<1xf32> to vector<1x1xf32>
    %cst_22 = arith.constant 1.000000e+00 : f32
    %cst_23 = arith.constant 0.000000e+00 : f32
    %52 = vector.broadcast %cst_22 : f32 to vector<1x256xf32>
    %53 = vector.broadcast %cst_23 : f32 to vector<1x256xf32>
    %54 = arith.select %46, %52, %53 : vector<1x256xi1>, vector<1x256xf32>
    %cst_24 = arith.constant dense<0.000000e+00> : vector<1xf32>
    %55 = vector.multi_reduction <add>, %54, %cst_24 [1] : vector<1x256xf32> to vector<1xf32>
    %56 = vector.shape_cast %55 : vector<1xf32> to vector<1x1xf32>
    %cst_25 = arith.constant dense<0.000000e+00> : vector<1xf32>
    %57 = vector.multi_reduction <add>, %47, %cst_25 [1] : vector<1x256xf32> to vector<1xf32>
    %58 = vector.shape_cast %57 : vector<1xf32> to vector<1x1xf32>
    %c3_i32 = arith.constant 3 : i32
    %59 = vector.broadcast %c3_i32 : i32 to vector<1x256xi32>
    %60 = arith.cmpi eq, %6, %59 : vector<1x256xi32>
    %61 = vector.extract_strided_slice %16 {offsets = [3, 0], sizes = [1, 256], strides = [1, 1]} : vector<4x256xf32> to vector<1x256xf32>
    %cst_26 = arith.constant 0.000000e+00 : f32
    %62 = vector.broadcast %cst_26 : f32 to vector<1x256xf32>
    %63 = arith.select %60, %61, %62 : vector<1x256xi1>, vector<1x256xf32>
    %cst_27 = arith.constant dense<0.000000e+00> : vector<1xf32>
    %64 = vector.multi_reduction <add>, %63, %cst_27 [1] : vector<1x256xf32> to vector<1xf32>
    %65 = vector.shape_cast %64 : vector<1xf32> to vector<1x1xf32>
    %cst_28 = arith.constant 1.000000e+00 : f32
    %cst_29 = arith.constant 0.000000e+00 : f32
    %66 = vector.broadcast %cst_28 : f32 to vector<1x256xf32>
    %67 = vector.broadcast %cst_29 : f32 to vector<1x256xf32>
    %68 = arith.select %60, %66, %67 : vector<1x256xi1>, vector<1x256xf32>
    %cst_30 = arith.constant dense<0.000000e+00> : vector<1xf32>
    %69 = vector.multi_reduction <add>, %68, %cst_30 [1] : vector<1x256xf32> to vector<1xf32>
    %70 = vector.shape_cast %69 : vector<1xf32> to vector<1x1xf32>
    %cst_31 = arith.constant dense<0.000000e+00> : vector<1xf32>
    %71 = vector.multi_reduction <add>, %61, %cst_31 [1] : vector<1x256xf32> to vector<1xf32>
    %72 = vector.shape_cast %71 : vector<1xf32> to vector<1x1xf32>
    %c0_32 = arith.constant 0 : index
    %c0_33 = arith.constant 0 : index
    %c0_34 = arith.constant 0 : index
    %c0_35 = arith.constant 0 : index
    %73 = vector.load %arg5[%c0_32, %c0_33, %c0_34, %c0_35] : memref<1x1x1x4xf32, #tpu.memory_space<vmem>>, vector<1x1x1x4xf32>
    %74 = vector.shape_cast %73 : vector<1x1x1x4xf32> to vector<1x4xf32>
    %75 = tpu.iota {dimensions = array<i32: 1>} : vector<1x4xi32>
    %cst_36 = arith.constant 0.000000e+00 : f32
    %76 = vector.broadcast %cst_36 : f32 to vector<1x4xf32>
    %c0_i32_37 = arith.constant 0 : i32
    %77 = vector.broadcast %c0_i32_37 : i32 to vector<1x4xi32>
    %78 = arith.cmpi eq, %75, %77 : vector<1x4xi32>
    %cst_38 = arith.constant 0.000000e+00 : f32
    %79 = vector.shape_cast %23 : vector<1x1xf32> to vector<1x1xf32>
    %80 = vector.broadcast %79 : vector<1x1xf32> to vector<1x4xf32>
    %81 = vector.broadcast %cst_38 : f32 to vector<1x4xf32>
    %82 = arith.select %78, %80, %81 : vector<1x4xi1>, vector<1x4xf32>
    %83 = arith.addf %76, %82 : vector<1x4xf32>
    %c1_i32_39 = arith.constant 1 : i32
    %84 = vector.broadcast %c1_i32_39 : i32 to vector<1x4xi32>
    %85 = arith.cmpi eq, %75, %84 : vector<1x4xi32>
    %cst_40 = arith.constant 0.000000e+00 : f32
    %86 = vector.shape_cast %37 : vector<1x1xf32> to vector<1x1xf32>
    %87 = vector.broadcast %86 : vector<1x1xf32> to vector<1x4xf32>
    %88 = vector.broadcast %cst_40 : f32 to vector<1x4xf32>
    %89 = arith.select %85, %87, %88 : vector<1x4xi1>, vector<1x4xf32>
    %90 = arith.addf %83, %89 : vector<1x4xf32>
    %c2_i32_41 = arith.constant 2 : i32
    %91 = vector.broadcast %c2_i32_41 : i32 to vector<1x4xi32>
    %92 = arith.cmpi eq, %75, %91 : vector<1x4xi32>
    %cst_42 = arith.constant 0.000000e+00 : f32
    %93 = vector.shape_cast %51 : vector<1x1xf32> to vector<1x1xf32>
    %94 = vector.broadcast %93 : vector<1x1xf32> to vector<1x4xf32>
    %95 = vector.broadcast %cst_42 : f32 to vector<1x4xf32>
    %96 = arith.select %92, %94, %95 : vector<1x4xi1>, vector<1x4xf32>
    %97 = arith.addf %90, %96 : vector<1x4xf32>
    %c3_i32_43 = arith.constant 3 : i32
    %98 = vector.broadcast %c3_i32_43 : i32 to vector<1x4xi32>
    %99 = arith.cmpi eq, %75, %98 : vector<1x4xi32>
    %cst_44 = arith.constant 0.000000e+00 : f32
    %100 = vector.shape_cast %65 : vector<1x1xf32> to vector<1x1xf32>
    %101 = vector.broadcast %100 : vector<1x1xf32> to vector<1x4xf32>
    %102 = vector.broadcast %cst_44 : f32 to vector<1x4xf32>
    %103 = arith.select %99, %101, %102 : vector<1x4xi1>, vector<1x4xf32>
    %104 = arith.addf %97, %103 : vector<1x4xf32>
    %105 = arith.addf %74, %104 : vector<1x4xf32>
    %c0_45 = arith.constant 0 : index
    %c0_46 = arith.constant 0 : index
    %c0_47 = arith.constant 0 : index
    %c0_48 = arith.constant 0 : index
    %106 = vector.load %arg5[%c0_45, %c0_46, %c0_47, %c0_48] : memref<1x1x1x4xf32, #tpu.memory_space<vmem>>, vector<1x1x1x4xf32>
    %107 = vector.shape_cast %106 : vector<1x1x1x4xf32> to vector<1x4xf32>
    %108 = vector.shape_cast %105 : vector<1x4xf32> to vector<1x1x1x4xf32>
    tpu.vector_store %arg5[%c0_45, %c0_46, %c0_47, %c0_48], %108 {strides = array<i32>} : memref<1x1x1x4xf32, #tpu.memory_space<vmem>>, vector<1x1x1x4xf32>,
    %c0_49 = arith.constant 0 : index
    %c0_50 = arith.constant 0 : index
    %c0_51 = arith.constant 0 : index
    %c0_52 = arith.constant 0 : index
    %109 = vector.load %arg6[%c0_49, %c0_50, %c0_51, %c0_52] : memref<1x1x1x4xf32, #tpu.memory_space<vmem>>, vector<1x1x1x4xf32>
    %110 = vector.shape_cast %109 : vector<1x1x1x4xf32> to vector<1x4xf32>
    %111 = tpu.iota {dimensions = array<i32: 1>} : vector<1x4xi32>
    %cst_53 = arith.constant 0.000000e+00 : f32
    %112 = vector.broadcast %cst_53 : f32 to vector<1x4xf32>
    %c0_i32_54 = arith.constant 0 : i32
    %113 = vector.broadcast %c0_i32_54 : i32 to vector<1x4xi32>
    %114 = arith.cmpi eq, %111, %113 : vector<1x4xi32>
    %cst_55 = arith.constant 0.000000e+00 : f32
    %115 = vector.shape_cast %30 : vector<1x1xf32> to vector<1x1xf32>
    %116 = vector.broadcast %115 : vector<1x1xf32> to vector<1x4xf32>
    %117 = vector.broadcast %cst_55 : f32 to vector<1x4xf32>
    %118 = arith.select %114, %116, %117 : vector<1x4xi1>, vector<1x4xf32>
    %119 = arith.addf %112, %118 : vector<1x4xf32>
    %c1_i32_56 = arith.constant 1 : i32
    %120 = vector.broadcast %c1_i32_56 : i32 to vector<1x4xi32>
    %121 = arith.cmpi eq, %111, %120 : vector<1x4xi32>
    %cst_57 = arith.constant 0.000000e+00 : f32
    %122 = vector.shape_cast %44 : vector<1x1xf32> to vector<1x1xf32>
    %123 = vector.broadcast %122 : vector<1x1xf32> to vector<1x4xf32>
    %124 = vector.broadcast %cst_57 : f32 to vector<1x4xf32>
    %125 = arith.select %121, %123, %124 : vector<1x4xi1>, vector<1x4xf32>
    %126 = arith.addf %119, %125 : vector<1x4xf32>
    %c2_i32_58 = arith.constant 2 : i32
    %127 = vector.broadcast %c2_i32_58 : i32 to vector<1x4xi32>
    %128 = arith.cmpi eq, %111, %127 : vector<1x4xi32>
    %cst_59 = arith.constant 0.000000e+00 : f32
    %129 = vector.shape_cast %58 : vector<1x1xf32> to vector<1x1xf32>
    %130 = vector.broadcast %129 : vector<1x1xf32> to vector<1x4xf32>
    %131 = vector.broadcast %cst_59 : f32 to vector<1x4xf32>
    %132 = arith.select %128, %130, %131 : vector<1x4xi1>, vector<1x4xf32>
    %133 = arith.addf %126, %132 : vector<1x4xf32>
    %c3_i32_60 = arith.constant 3 : i32
    %134 = vector.broadcast %c3_i32_60 : i32 to vector<1x4xi32>
    %135 = arith.cmpi eq, %111, %134 : vector<1x4xi32>
    %cst_61 = arith.constant 0.000000e+00 : f32
    %136 = vector.shape_cast %72 : vector<1x1xf32> to vector<1x1xf32>
    %137 = vector.broadcast %136 : vector<1x1xf32> to vector<1x4xf32>
    %138 = vector.broadcast %cst_61 : f32 to vector<1x4xf32>
    %139 = arith.select %135, %137, %138 : vector<1x4xi1>, vector<1x4xf32>
    %140 = arith.addf %133, %139 : vector<1x4xf32>
    %141 = arith.addf %110, %140 : vector<1x4xf32>
    %c0_62 = arith.constant 0 : index
    %c0_63 = arith.constant 0 : index
    %c0_64 = arith.constant 0 : index
    %c0_65 = arith.constant 0 : index
    %142 = vector.load %arg6[%c0_62, %c0_63, %c0_64, %c0_65] : memref<1x1x1x4xf32, #tpu.memory_space<vmem>>, vector<1x1x1x4xf32>
    %143 = vector.shape_cast %142 : vector<1x1x1x4xf32> to vector<1x4xf32>
    %144 = vector.shape_cast %141 : vector<1x4xf32> to vector<1x1x1x4xf32>
    tpu.vector_store %arg6[%c0_62, %c0_63, %c0_64, %c0_65], %144 {strides = array<i32>} : memref<1x1x1x4xf32, #tpu.memory_space<vmem>>, vector<1x1x1x4xf32>,
    %c0_66 = arith.constant 0 : index
    %c0_67 = arith.constant 0 : index
    %c0_68 = arith.constant 0 : index
    %c0_69 = arith.constant 0 : index
    %145 = vector.load %arg7[%c0_66, %c0_67, %c0_68, %c0_69] : memref<1x1x1x4xf32, #tpu.memory_space<vmem>>, vector<1x1x1x4xf32>
    %146 = vector.shape_cast %145 : vector<1x1x1x4xf32> to vector<1x4xf32>
    %147 = tpu.iota {dimensions = array<i32: 1>} : vector<1x4xi32>
    %cst_70 = arith.constant 0.000000e+00 : f32
    %148 = vector.broadcast %cst_70 : f32 to vector<1x4xf32>
    %c0_i32_71 = arith.constant 0 : i32
    %149 = vector.broadcast %c0_i32_71 : i32 to vector<1x4xi32>
    %150 = arith.cmpi eq, %147, %149 : vector<1x4xi32>
    %cst_72 = arith.constant 0.000000e+00 : f32
    %151 = vector.shape_cast %28 : vector<1x1xf32> to vector<1x1xf32>
    %152 = vector.broadcast %151 : vector<1x1xf32> to vector<1x4xf32>
    %153 = vector.broadcast %cst_72 : f32 to vector<1x4xf32>
    %154 = arith.select %150, %152, %153 : vector<1x4xi1>, vector<1x4xf32>
    %155 = arith.addf %148, %154 : vector<1x4xf32>
    %c1_i32_73 = arith.constant 1 : i32
    %156 = vector.broadcast %c1_i32_73 : i32 to vector<1x4xi32>
    %157 = arith.cmpi eq, %147, %156 : vector<1x4xi32>
    %cst_74 = arith.constant 0.000000e+00 : f32
    %158 = vector.shape_cast %42 : vector<1x1xf32> to vector<1x1xf32>
    %159 = vector.broadcast %158 : vector<1x1xf32> to vector<1x4xf32>
    %160 = vector.broadcast %cst_74 : f32 to vector<1x4xf32>
    %161 = arith.select %157, %159, %160 : vector<1x4xi1>, vector<1x4xf32>
    %162 = arith.addf %155, %161 : vector<1x4xf32>
    %c2_i32_75 = arith.constant 2 : i32
    %163 = vector.broadcast %c2_i32_75 : i32 to vector<1x4xi32>
    %164 = arith.cmpi eq, %147, %163 : vector<1x4xi32>
    %cst_76 = arith.constant 0.000000e+00 : f32
    %165 = vector.shape_cast %56 : vector<1x1xf32> to vector<1x1xf32>
    %166 = vector.broadcast %165 : vector<1x1xf32> to vector<1x4xf32>
    %167 = vector.broadcast %cst_76 : f32 to vector<1x4xf32>
    %168 = arith.select %164, %166, %167 : vector<1x4xi1>, vector<1x4xf32>
    %169 = arith.addf %162, %168 : vector<1x4xf32>
    %c3_i32_77 = arith.constant 3 : i32
    %170 = vector.broadcast %c3_i32_77 : i32 to vector<1x4xi32>
    %171 = arith.cmpi eq, %147, %170 : vector<1x4xi32>
    %cst_78 = arith.constant 0.000000e+00 : f32
    %172 = vector.shape_cast %70 : vector<1x1xf32> to vector<1x1xf32>
    %173 = vector.broadcast %172 : vector<1x1xf32> to vector<1x4xf32>
    %174 = vector.broadcast %cst_78 : f32 to vector<1x4xf32>
    %175 = arith.select %171, %173, %174 : vector<1x4xi1>, vector<1x4xf32>
    %176 = arith.addf %169, %175 : vector<1x4xf32>
    %177 = arith.addf %146, %176 : vector<1x4xf32>
    %c0_79 = arith.constant 0 : index
    %c0_80 = arith.constant 0 : index
    %c0_81 = arith.constant 0 : index
    %c0_82 = arith.constant 0 : index
    %178 = vector.load %arg7[%c0_79, %c0_80, %c0_81, %c0_82] : memref<1x1x1x4xf32, #tpu.memory_space<vmem>>, vector<1x1x1x4xf32>
    %179 = vector.shape_cast %178 : vector<1x1x1x4xf32> to vector<1x4xf32>
    %180 = vector.shape_cast %177 : vector<1x4xf32> to vector<1x1x1x4xf32>
    tpu.vector_store %arg7[%c0_79, %c0_80, %c0_81, %c0_82], %180 {strides = array<i32>} : memref<1x1x1x4xf32, #tpu.memory_space<vmem>>, vector<1x1x1x4xf32>,
    return
  }
  func.func @transform_0(%arg0: i32, %arg1: i32, %arg2: i32) -> (i32, i32, i32) {
    %c1_i32 = arith.constant 1 : i32
    %0 = arith.muli %arg0, %c1_i32 : i32
    %1 = arith.addi %0, %arg2 : i32
    %c0_i32 = arith.constant 0 : i32
    %c0_i32_0 = arith.constant 0 : i32
    return %arg1, %c0_i32, %1 : i32, i32, i32
  }
  func.func @transform_1(%arg0: i32, %arg1: i32, %arg2: i32) -> (i32, i32, i32) {
    %c1_i32 = arith.constant 1 : i32
    %0 = arith.muli %arg0, %c1_i32 : i32
    %1 = arith.addi %0, %arg2 : i32
    %c0_i32 = arith.constant 0 : i32
    %c0_i32_0 = arith.constant 0 : i32
    return %arg1, %c0_i32, %1 : i32, i32, i32
  }
  func.func @transform_2(%arg0: i32, %arg1: i32, %arg2: i32) -> (i32, i32, i32, i32) {
    %c0_i32 = arith.constant 0 : i32
    %c0_i32_0 = arith.constant 0 : i32
    %c0_i32_1 = arith.constant 0 : i32
    return %arg0, %arg1, %c0_i32, %c0_i32_0 : i32, i32, i32, i32
  }
  func.func @transform_3(%arg0: i32, %arg1: i32, %arg2: i32) -> (i32, i32, i32, i32) {
    %c0_i32 = arith.constant 0 : i32
    %c0_i32_0 = arith.constant 0 : i32
    %c0_i32_1 = arith.constant 0 : i32
    return %arg0, %arg1, %c0_i32, %c0_i32_0 : i32, i32, i32, i32
  }
  func.func @transform_4(%arg0: i32, %arg1: i32, %arg2: i32) -> (i32, i32, i32, i32) {
    %c0_i32 = arith.constant 0 : i32
    %c0_i32_0 = arith.constant 0 : i32
    %c0_i32_1 = arith.constant 0 : i32
    return %arg0, %arg1, %c0_i32, %c0_i32_0 : i32, i32, i32, i32
  }
}

</mosaic_0001>

<llo_original>
// kernel: tpu_custom_call.1
$region0: #{tpu_custom_call.1}
  #allocation0 [shape = 'u32[]', space=smem, size = 0x4, offset = 0x4, fixed_abs, tag = 'smem constant byte address 0x4 - core index']
  #allocation1 [shape = 'u32[144,128]{1,0:T(1,128)}', space=vmem, size = 0x12000, scoped, tag = 'internal scratch']
  %s0 = inlined_call_operand.hbm [shape: f32[2,4,256], index: 0, kind: input, shape index: {}]
  %s1 = inlined_call_operand.hbm [shape: s32[2,1,256], index: 1, kind: input, shape index: {}]
  %s2 = inlined_call_operand.hbm [shape: f32[1,2,1,4], index: 2, kind: output, shape index: {0}]
  %s3 = inlined_call_operand.hbm [shape: f32[1,2,1,4], index: 3, kind: output, shape index: {1}]
  %s4 = inlined_call_operand.hbm [shape: f32[1,2,1,4], index: 4, kind: output, shape index: {2}]
  %5 = xla_tuple %s2, %s3, %s4
  %s6 = sld [smem:[#allocation0]]
  $region69: #{tpu_custom_call.1} parent=0
    _
  %s8 = ssub.s32 1, %s6
  %s9 = scalar_select 0, %s8, %s6
  $region1: #{tpu_custom_call.1} parent=0
    #allocation2 [shape = 'u8[8192]{0}', space=vmem, size = 0x2000, scoped, tag = 'input window, operand 0']
    #allocation3 [shape = 's32[2]{0}', space=sflag, size = 0x8, scoped, tag = 'scoped memory for tpu_custom_call.1']
    #allocation4 [shape = 's32[2]{0}', space=sflag, size = 0x8, scoped, tag = 'scoped memory for tpu_custom_call.1']
    #allocation5 [shape = 'u8[2048]{0}', space=vmem, size = 0x800, scoped, tag = 'input window, operand 1']
    #allocation6 [shape = 's32[2]{0}', space=sflag, size = 0x8, scoped, tag = 'scoped memory for tpu_custom_call.1']
    #allocation7 [shape = 'u8[1024]{0}', space=vmem, size = 0x400, scoped, tag = 'output window, operand 0']
    #allocation8 [shape = 'u8[1024]{0}', space=vmem, size = 0x400, scoped, tag = 'output window, operand 1']
    #allocation9 [shape = 's32[2]{0}', space=sflag, size = 0x8, scoped, tag = 'scoped memory for tpu_custom_call.1']
    #allocation10 [shape = 'u8[1024]{0}', space=vmem, size = 0x400, scoped, tag = 'output window, operand 2']
    %10 = vsyncpa [#allocation3], 0
    %s11 = scalar_lea.sflag [#allocation3], 1
    %12 = vsyncpa %s11, 0
    %13 = vsyncpa [#allocation6], 0
    %s14 = scalar_lea.sflag [#allocation6], 1
    %15 = vsyncpa %s14, 0
    %16 = vsyncpa [#allocation4], 0
    %s17 = scalar_lea.sflag [#allocation4], 1
    %18 = vsyncpa %s17, 0
    %19 = vsyncpa [#allocation9], 0
    %s20 = scalar_lea.sflag [#allocation9], 1
    %21 = vsyncpa %s20, 0
    loop: start=0, step=1, limit=4
    $region2: #{tpu_custom_call.1} parent=1 // loop_pre_header
      _
    $region3: #{tpu_custom_call.1} parent=1 // loop_header
      %s23 = sphi 0, %s27
      %p24 = scmp.ge.s32.totalorder %s23, 4
      %s30 = sphi 0, %s49
      %s31 = sphi 0, %s45
      %s32 = sphi 0, %s41
      %s33 = sphi 0, %s30
      %s34 = sphi 0, %s31
      %s35 = sphi 0, %s32
      %s36 = sphi 0, %s33
      %s37 = sphi 0, %s34
      %s38 = sphi 0, %s35
      %s56 = sphi 0, %s58
      %s59 = sphi 0, %s56
      %s60 = sphi 0, %s59
      %s76 = sphi 0, %s60
      %s86 = sphi 0, %s88
      %s89 = sphi 0, %s86
      %s90 = sphi 0, %s89
      %s106 = sphi 0, %s90
      %s114 = sphi 0, %s116
      %s117 = sphi 0, %s114
      %s118 = sphi 0, %s117
      %s134 = sphi 0, %s118
      %s142 = sphi 0, %s144
      %s145 = sphi 0, %s142
      %s146 = sphi 0, %s145
      %s162 = sphi 0, %s146
      %s170 = sphi 0, %s172
      %s173 = sphi 0, %s170
      %s174 = sphi 0, %s173
      %s190 = sphi 0, %s174
    $region4: #{tpu_custom_call.1} parent=1 // loop_header_branch
      %26 = sbr.rel (%p24) target = $region8
    $region5: #{tpu_custom_call.1} parent=1 // loop_body
      %s28 = ssub.s32 %s23, 1
      %s29 = ssub.s32 %s23, 2
      %s39 = sadd.s32 1, %s32
      %p40 = scmp.ge.s32.totalorder %s39, 1
      %s41 = scalar_select %p40, 0, %s39
      %s42 = sadd.s32 1, %s31
      %s43 = scalar_select %p40, %s42, %s31
      %p44 = scmp.ge.s32.totalorder %s43, 2
      %s45 = scalar_select %p44, 0, %s43
      %s46 = sadd.s32 1, %s30
      %s47 = scalar_select %p44, %s46, %s30
      %p48 = scmp.ge.s32.totalorder %s47, 1
      %s49 = scalar_select %p48, 0, %s47
      %s50 = sadd.s32 %s30, %s32
      %s51 = sadd.s32 %s49, %s41
      %s52 = ssub.s32 %s31, %s45
      %s53 = ssub.s32 %s50, %s51
      %s54 = sor.u32 %s52, %s53
      %p55 = scmp.eq.s32.totalorder %s54, 0
      %s57 = sadd.s32 %s56, 1
      %s58 = scalar_select %p55, %s56, %s57
      %p61 = pneg %p55
      %p62 = scmp.eq.s32.totalorder %s23, 1
      %p63 = por %p61, %p62
      %p64 = scmp.ne.s32.totalorder %s56, %s59
      %p65 = scmp.eq.s32.totalorder %s23, 0
      %p66 = por %p64, %p65
      %p67 = scmp.ne.s32.totalorder %s56, %s59
      %p68 = scmp.eq.s32.totalorder %s28, 1
      %p69 = por %p67, %p68
      %p70 = scmp.ne.s32.totalorder %s59, %s60
      %p71 = scmp.eq.s32.totalorder %s28, 0
      %p72 = por %p70, %p71
      %p73 = scmp.ne.s32.totalorder %s59, %s60
      %p74 = scmp.eq.s32.totalorder %s29, 1
      %p75 = por %p73, %p74
      %p77 = scmp.ne.s32.totalorder %s60, %s76
      %p78 = scmp.eq.s32.totalorder %s29, 0
      %p79 = por %p77, %p78
      %s80 = sadd.s32 %s30, %s32
      %s81 = sadd.s32 %s49, %s41
      %s82 = ssub.s32 %s31, %s45
      %s83 = ssub.s32 %s80, %s81
      %s84 = sor.u32 %s82, %s83
      %p85 = scmp.eq.s32.totalorder %s84, 0
      %s87 = sadd.s32 %s86, 1
      %s88 = scalar_select %p85, %s86, %s87
      %p91 = pneg %p85
      %p92 = scmp.eq.s32.totalorder %s23, 1
      %p93 = por %p91, %p92
      %p94 = scmp.ne.s32.totalorder %s86, %s89
      %p95 = scmp.eq.s32.totalorder %s23, 0
      %p96 = por %p94, %p95
      %p97 = scmp.ne.s32.totalorder %s86, %s89
      %p98 = scmp.eq.s32.totalorder %s28, 1
      %p99 = por %p97, %p98
      %p100 = scmp.ne.s32.totalorder %s89, %s90
      %p101 = scmp.eq.s32.totalorder %s28, 0
      %p102 = por %p100, %p101
      %p103 = scmp.ne.s32.totalorder %s89, %s90
      %p104 = scmp.eq.s32.totalorder %s29, 1
      %p105 = por %p103, %p104
      %p107 = scmp.ne.s32.totalorder %s90, %s106
      %p108 = scmp.eq.s32.totalorder %s29, 0
      %p109 = por %p107, %p108
      %s110 = ssub.s32 %s30, %s49
      %s111 = ssub.s32 %s31, %s45
      %s112 = sor.u32 %s110, %s111
      %p113 = scmp.eq.s32.totalorder %s112, 0
      %s115 = sadd.s32 %s114, 1
      %s116 = scalar_select %p113, %s114, %s115
      %p119 = pneg %p113
      %p120 = scmp.eq.s32.totalorder %s23, 1
      %p121 = por %p119, %p120
      %p122 = scmp.ne.s32.totalorder %s114, %s117
      %p123 = scmp.eq.s32.totalorder %s23, 0
      %p124 = por %p122, %p123
      %p125 = scmp.ne.s32.totalorder %s114, %s117
      %p126 = scmp.eq.s32.totalorder %s28, 1
      %p127 = por %p125, %p126
      %p128 = scmp.ne.s32.totalorder %s117, %s118
      %p129 = scmp.eq.s32.totalorder %s28, 0
      %p130 = por %p128, %p129
      %p131 = scmp.ne.s32.totalorder %s117, %s118
      %p132 = scmp.eq.s32.totalorder %s29, 1
      %p133 = por %p131, %p132
      %p135 = scmp.ne.s32.totalorder %s118, %s134
      %p136 = scmp.eq.s32.totalorder %s29, 0
      %p137 = por %p135, %p136
      %s138 = ssub.s32 %s30, %s49
      %s139 = ssub.s32 %s31, %s45
      %s140 = sor.u32 %s138, %s139
      %p141 = scmp.eq.s32.totalorder %s140, 0
      %s143 = sadd.s32 %s142, 1
      %s144 = scalar_select %p141, %s142, %s143
      %p147 = pneg %p141
      %p148 = scmp.eq.s32.totalorder %s23, 1
      %p149 = por %p147, %p148
      %p150 = scmp.ne.s32.totalorder %s142, %s145
      %p151 = scmp.eq.s32.totalorder %s23, 0
      %p152 = por %p150, %p151
      %p153 = scmp.ne.s32.totalorder %s142, %s145
      %p154 = scmp.eq.s32.totalorder %s28, 1
      %p155 = por %p153, %p154
      %p156 = scmp.ne.s32.totalorder %s145, %s146
      %p157 = scmp.eq.s32.totalorder %s28, 0
      %p158 = por %p156, %p157
      %p159 = scmp.ne.s32.totalorder %s145, %s146
      %p160 = scmp.eq.s32.totalorder %s29, 1
      %p161 = por %p159, %p160
      %p163 = scmp.ne.s32.totalorder %s146, %s162
      %p164 = scmp.eq.s32.totalorder %s29, 0
      %p165 = por %p163, %p164
      %s166 = ssub.s32 %s30, %s49
      %s167 = ssub.s32 %s31, %s45
      %s168 = sor.u32 %s166, %s167
      %p169 = scmp.eq.s32.totalorder %s168, 0
      %s171 = sadd.s32 %s170, 1
      %s172 = scalar_select %p169, %s170, %s171
      %p175 = pneg %p169
      %p176 = scmp.eq.s32.totalorder %s23, 1
      %p177 = por %p175, %p176
      %p178 = scmp.ne.s32.totalorder %s170, %s173
      %p179 = scmp.eq.s32.totalorder %s23, 0
      %p180 = por %p178, %p179
      %p181 = scmp.ne.s32.totalorder %s170, %s173
      %p182 = scmp.eq.s32.totalorder %s28, 1
      %p183 = por %p181, %p182
      %p184 = scmp.ne.s32.totalorder %s173, %s174
      %p185 = scmp.eq.s32.totalorder %s28, 0
      %p186 = por %p184, %p185
      %p187 = scmp.ne.s32.totalorder %s173, %s174
      %p188 = scmp.eq.s32.totalorder %s29, 1
      %p189 = por %p187, %p188
      %p191 = scmp.ne.s32.totalorder %s174, %s190
      %p192 = scmp.eq.s32.totalorder %s29, 0
      %p193 = por %p191, %p192
      %p194 = scmp.le.s32.totalorder 1, %s23
      %p195 = scmp.lt.s32.totalorder %s23, 3
      %p196 = pnand %p194, %p195
      %p197 = pneg %p196
      // Predicated region
      $region9: #{tpu_custom_call.1} parent=5 // pred_check
        _
      $region10: #{tpu_custom_call.1} parent=5 // pred_check_branch
        %199 = sbr.rel (%p196) target = $region12
      $region11: #{tpu_custom_call.1} parent=5 // pred_region
        %s200 = ssub.s32 %s23, 1
      $region12: #{tpu_custom_call.1} parent=5 // pred_fallthru
        _
      %p201 = scmp.lt.s32.totalorder %s23, 2
      // Predicated region
      $region13: #{tpu_custom_call.1} parent=5 // pred_check
        %p202 = pneg %p201
      $region14: #{tpu_custom_call.1} parent=5 // pred_check_branch
        %204 = sbr.rel (%p202) target = $region16
      $region15: #{tpu_custom_call.1} parent=5 // pred_region
        // Predicated region
        $region17: #{tpu_custom_call.1} parent=15 // pred_check
          %p205 = pneg %p66
        $region18: #{tpu_custom_call.1} parent=15 // pred_check_branch
          %207 = sbr.rel (%p205) target = $region20
        $region19: #{tpu_custom_call.1} parent=15 // pred_region
          %s208 = sand.u32 %s56, 1
          %s209 = scalar_lea.sflag [#allocation3], %s208
          %s210 = sand.u32 %s56, 1
          %s211 = smul.addr %s210, 8
          %s212 = scalar_lea.vmem [#allocation2], %s211
          %s213 = sadd.s32 %s30, %s32
          %s214 = smul.u32 2, %s213
          %s216 = ssub.s32 128, 128
          %217 = vsyncadd %s209, %s216
          %s218 = smul.addr %s31, 2
          %s219 = sadd.s32 %s214, %s218
          %s220 = smul.addr %s219, 64
          %s221 = scalar_lea.hbm %s0, %s220
          %s223 = sshll.u32 %s212, 4
          %s224 = int_to_ptr.vmem [resolvable:$true] %s223
          %226 = dma.hbm_to_vmem [thread:$0]  %s221, 128, %s224, %s209
        $region20: #{tpu_custom_call.1} parent=15 // pred_fallthru
          _
        // Predicated region
        $region21: #{tpu_custom_call.1} parent=15 // pred_check
          %p227 = pneg %p96
        $region22: #{tpu_custom_call.1} parent=15 // pred_check_branch
          %229 = sbr.rel (%p227) target = $region24
        $region23: #{tpu_custom_call.1} parent=15 // pred_region
          %s230 = sand.u32 %s86, 1
          %s231 = scalar_lea.sflag [#allocation6], %s230
          %s232 = sand.u32 %s86, 1
          %s233 = smul.addr %s232, 2
          %s234 = scalar_lea.vmem [#allocation5], %s233
          %s235 = sadd.s32 %s30, %s32
          %s236 = smul.u32 2, %s235
          %s238 = ssub.s32 32, 32
          %239 = vsyncadd %s231, %s238
          %s240 = smul.addr %s31, 2
          %s241 = sadd.s32 %s236, %s240
          %s242 = smul.addr %s241, 16
          %s243 = scalar_lea.hbm %s1, %s242
          %s245 = sshll.u32 %s234, 4
          %s246 = int_to_ptr.vmem [resolvable:$true] %s245
          %248 = dma.hbm_to_vmem [thread:$0]  %s243, 32, %s246, %s231
        $region24: #{tpu_custom_call.1} parent=15 // pred_fallthru
          _
      $region16: #{tpu_custom_call.1} parent=5 // pred_fallthru
        _
      %p249 = scmp.le.s32.totalorder 1, %s23
      %p250 = scmp.lt.s32.totalorder %s23, 3
      %p251 = pnand %p249, %p250
      %p252 = pneg %p251
      // Predicated region
      $region25: #{tpu_custom_call.1} parent=5 // pred_check
        _
      $region26: #{tpu_custom_call.1} parent=5 // pred_check_branch
        %254 = sbr.rel (%p251) target = $region28
      $region27: #{tpu_custom_call.1} parent=5 // pred_region
        %s255 = ssub.s32 %s23, 1
        %s256 = sand.u32 %s59, 1
        %s257 = scalar_lea.sflag [#allocation3], %s256
        %s258 = sand.u32 %s59, 1
        %s259 = smul.addr %s258, 8
        %s260 = scalar_lea.vmem [#allocation2], %s259
        // Predicated region
        $region29: #{tpu_custom_call.1} parent=27 // pred_check
          %p261 = pneg %p72
        $region30: #{tpu_custom_call.1} parent=27 // pred_check_branch
          %263 = sbr.rel (%p261) target = $region32
        $region31: #{tpu_custom_call.1} parent=27 // pred_region
          %264 = dma.done %s257, 128
        $region32: #{tpu_custom_call.1} parent=27 // pred_fallthru
          _
        %s265 = sand.u32 %s89, 1
        %s266 = scalar_lea.sflag [#allocation6], %s265
        %s267 = sand.u32 %s89, 1
        %s268 = smul.addr %s267, 2
        %s269 = scalar_lea.vmem [#allocation5], %s268
        // Predicated region
        $region33: #{tpu_custom_call.1} parent=27 // pred_check
          %p270 = pneg %p102
        $region34: #{tpu_custom_call.1} parent=27 // pred_check_branch
          %272 = sbr.rel (%p270) target = $region36
        $region35: #{tpu_custom_call.1} parent=27 // pred_region
          %273 = dma.done %s266, 32
        $region36: #{tpu_custom_call.1} parent=27 // pred_fallthru
          _
        %s274 = sand.u32 %s59, 1
        %s275 = scalar_lea.sflag [#allocation3], %s274
        %s276 = sand.u32 %s59, 1
        %s277 = smul.addr %s276, 8
        %s278 = scalar_lea.vmem [#allocation2], %s277
        %p279 = pneg %p72
        %p280 = pneg %p69
        %s281 = sand.u32 %s89, 1
        %s282 = scalar_lea.sflag [#allocation6], %s281
        %s283 = sand.u32 %s89, 1
        %s284 = smul.addr %s283, 2
        %s285 = scalar_lea.vmem [#allocation5], %s284
        %p286 = pneg %p102
        %p287 = pneg %p99
        %p288 = pneg %p130
        %p289 = pneg %p127
        %s290 = sand.u32 %s117, 1
        %s291 = scalar_lea.sflag [#allocation4], %s290
        %s292 = sand.u32 %s117, 1
        %s293 = scalar_lea.vmem [#allocation7], %s292
        %p294 = pneg %p158
        %p295 = pneg %p155
        %s296 = sand.u32 %s28, 1
        %s297 = scalar_lea.sflag [#allocation9], %s296
        %s298 = sand.u32 %s145, 1
        %s299 = scalar_lea.vmem [#allocation8], %s298
        %p300 = pneg %p186
        %p301 = pneg %p183
        %s302 = sand.u32 %s28, 1
        %s303 = scalar_lea.sflag [#allocation9], %s302
        %s304 = sand.u32 %s173, 1
        %s305 = scalar_lea.vmem [#allocation10], %s304
        %s306 = sadd.s32 %s33, %s35
        %s307 = smul.u32 2, %s306
        %s308 = sadd.s32 %s33, %s35
        %s309 = smul.u32 2, %s308
        %p310 = scmp.eq.s32.totalorder %s35, 0
        // Predicated region
        $region37: #{tpu_custom_call.1} parent=27 // pred_check
          %p311 = pneg %p310
        $region38: #{tpu_custom_call.1} parent=27 // pred_check_branch
          %313 = sbr.rel (%p311) target = $region40
        $region39: #{tpu_custom_call.1} parent=27 // pred_region
          %vm314 = vcmask 24576
          %315 = vst.msk [vmem:[%s293] sm:$0x1] %vm314, 0.0
          %316 = vst.msk [vmem:[%s299] sm:$0x1] %vm314, 0.0
          %317 = vst.msk [vmem:[%s305] sm:$0x1] %vm314, 0.0
        $region40: #{tpu_custom_call.1} parent=27 // pred_fallthru
          _
        %v318 = vld [vmem:[%s260] sm:$0xff]
        %v319 = vld [vmem:[%s269] sm:$0x3]
        %v321 = vcombine.high %v318, %v318
        %vm323 = vcmask 1043456
        %v324 = vsel %vm323, %v318, -inf
        %v325 = vrot.slane %v324, 4
        %v326 = vmax.f32 %v324, %v325
        %v327 = vrot.slane %v326, 2
        %v328 = vmax.f32 %v326, %v327
        %v329 = vrot.slane %v328, 1
        %v330 = vmax.f32 %v328, %v329
        %v331 = vsel %vm323, %v321, -inf
        %v332 = vrot.slane %v331, 4
        %v333 = vmax.f32 %v331, %v332
        %v334 = vrot.slane %v333, 2
        %v335 = vmax.f32 %v333, %v334
        %v336 = vrot.slane %v335, 1
        %v337 = vmax.f32 %v335, %v336
        %v340 = vcombine.low %v330, %v337
        %v342 = vsub.f32 %v318, %v340
        %v343 = vmul.f32 %v342, 1.442695
        %v344 = vpow.pop %v343
        %v346 = vcombine.high %v344, %v344
        %v348 = vsel %vm323, %v344, 0.0
        %v349 = vrot.slane %v348, 4
        %v350 = vadd.f32 %v348, %v349
        %v351 = vrot.slane %v350, 2
        %v352 = vadd.f32 %v350, %v351
        %v353 = vrot.slane %v352, 1
        %v354 = vadd.f32 %v352, %v353
        %v355 = vsel %vm323, %v346, 0.0
        %v356 = vrot.slane %v355, 4
        %v357 = vadd.f32 %v355, %v356
        %v358 = vrot.slane %v357, 2
        %v359 = vadd.f32 %v357, %v358
        %v360 = vrot.slane %v359, 1
        %v361 = vadd.f32 %v359, %v360
        %v362 = vrcp.pop %v354
        %v363 = vrcp.pop %v361
        %v366 = vcombine.low %v362, %v363
        %v368 = vmul.f32 %v344, %v366
        %vm369 = vcmp.eq.s32.totalorder %v319, 0
        %v372 = vunpack.c.l.s4 1966171168
        %v373 = vunpack.c.0.s8 %v372
        %v374 = vlaneseq
        %v375 = vshrl.u32 %v374, 7
        %v376 = vsub.s32 %v373, %v375
        %v377 = vrot.slane %v368, %v376
        %v379 = vunpack.c.l.s4 1966171168
        %v380 = vunpack.c.0.s8 %v379
        %v381 = vlaneseq
        %v382 = vshrl.u32 %v381, 7
        %v383 = vsub.s32 %v380, %v382
        %v384 = vrot.slane %v377, %v383
        %v386 = vsel %vm369, %v384, 0.0
        %v388 = vlaneseq
        %v389 = vshrl.u32 %v388, 7
        %v390 = vsub.s32 0, %v389
        %v391 = vrot.slane %v386, %v390
        %v392 = vlaneseq
        %v393 = vshrl.u32 %v392, 7
        %v394 = vsub.s32 1, %v393
        %v395 = vrot.slane %v386, %v394
        %vm398 = vcmask 1040384
        %v399 = vsel %vm398, %v391, 0.0
        %v400 = vsel %vm398, %v395, 0.0
        %v401 = vadd.f32 %v399, %v400
        %402 = vadd.xlane.f32.xlu0 %v401
        %v403 = vpop.xlane.xlu0 %402
        %v404 = vsel %vm369, 1.0, 0.0
        %v406 = vlaneseq
        %v407 = vshrl.u32 %v406, 7
        %v408 = vsub.s32 0, %v407
        %v409 = vrot.slane %v404, %v408
        %v410 = vlaneseq
        %v411 = vshrl.u32 %v410, 7
        %v412 = vsub.s32 1, %v411
        %v413 = vrot.slane %v404, %v412
        %v416 = vsel %vm398, %v409, 0.0
        %v417 = vsel %vm398, %v413, 0.0
        %v418 = vadd.f32 %v416, %v417
        %419 = vadd.xlane.f32.xlu0 %v418
        %v420 = vpop.xlane.xlu0 %419
        %v421 = vlaneseq
        %v422 = vshrl.u32 %v421, 7
        %v423 = vsub.s32 0, %v422
        %v424 = vrot.slane %v368, %v423
        %v425 = vlaneseq
        %v426 = vshrl.u32 %v425, 7
        %v427 = vsub.s32 4, %v426
        %v428 = vrot.slane %v368, %v427
        %v431 = vsel %vm398, %v424, 0.0
        %v432 = vsel %vm398, %v428, 0.0
        %v433 = vadd.f32 %v431, %v432
        %434 = vadd.xlane.f32.xlu0 %v433
        %v435 = vpop.xlane.xlu0 %434
        %vm436 = vcmp.eq.s32.totalorder %v319, 1
        %v437 = vcombine.high %v377, %v377
        %v439 = vunpack.c.l.s4 1966171168
        %v440 = vunpack.c.0.s8 %v439
        %v441 = vlaneseq
        %v442 = vshrl.u32 %v441, 7
        %v443 = vsub.s32 %v440, %v442
        %v444 = vrot.slane %v437, %v443
        %v446 = vsel %vm436, %v444, 0.0
        %v448 = vlaneseq
        %v449 = vshrl.u32 %v448, 7
        %v450 = vsub.s32 0, %v449
        %v451 = vrot.slane %v446, %v450
        %v452 = vlaneseq
        %v453 = vshrl.u32 %v452, 7
        %v454 = vsub.s32 1, %v453
        %v455 = vrot.slane %v446, %v454
        %v458 = vsel %vm398, %v451, 0.0
        %v459 = vsel %vm398, %v455, 0.0
        %v460 = vadd.f32 %v458, %v459
        %461 = vadd.xlane.f32.xlu0 %v460
        %v462 = vpop.xlane.xlu0 %461
        %v463 = vsel %vm436, 1.0, 0.0
        %v465 = vlaneseq
        %v466 = vshrl.u32 %v465, 7
        %v467 = vsub.s32 0, %v466
        %v468 = vrot.slane %v463, %v467
        %v469 = vlaneseq
        %v470 = vshrl.u32 %v469, 7
        %v471 = vsub.s32 1, %v470
        %v472 = vrot.slane %v463, %v471
        %v475 = vsel %vm398, %v468, 0.0
        %v476 = vsel %vm398, %v472, 0.0
        %v477 = vadd.f32 %v475, %v476
        %478 = vadd.xlane.f32.xlu0 %v477
        %v479 = vpop.xlane.xlu0 %478
        %v480 = vlaneseq
        %v481 = vshrl.u32 %v480, 7
        %v482 = vsub.s32 1, %v481
        %v483 = vrot.slane %v368, %v482
        %v484 = vlaneseq
        %v485 = vshrl.u32 %v484, 7
        %v486 = vsub.s32 5, %v485
        %v487 = vrot.slane %v368, %v486
        %vm490 = vcmask 1041409
        %v491 = vsel %vm490, %v483, 0.0
        %v492 = vsel %vm490, %v487, 0.0
        %v493 = vadd.f32 %v491, %v492
        %494 = vadd.xlane.f32.xlu0 %v493
        %v495 = vpop.xlane.xlu0 %494
        %vm496 = vcmp.eq.s32.totalorder %v319, 2
        %v497 = vcombine.high %v384, %v384
        %v499 = vsel %vm496, %v497, 0.0
        %v501 = vlaneseq
        %v502 = vshrl.u32 %v501, 7
        %v503 = vsub.s32 0, %v502
        %v504 = vrot.slane %v499, %v503
        %v505 = vlaneseq
        %v506 = vshrl.u32 %v505, 7
        %v507 = vsub.s32 1, %v506
        %v508 = vrot.slane %v499, %v507
        %v511 = vsel %vm398, %v504, 0.0
        %v512 = vsel %vm398, %v508, 0.0
        %v513 = vadd.f32 %v511, %v512
        %514 = vadd.xlane.f32.xlu0 %v513
        %v515 = vpop.xlane.xlu0 %514
        %v516 = vsel %vm496, 1.0, 0.0
        %v518 = vlaneseq
        %v519 = vshrl.u32 %v518, 7
        %v520 = vsub.s32 0, %v519
        %v521 = vrot.slane %v516, %v520
        %v522 = vlaneseq
        %v523 = vshrl.u32 %v522, 7
        %v524 = vsub.s32 1, %v523
        %v525 = vrot.slane %v516, %v524
        %v528 = vsel %vm398, %v521, 0.0
        %v529 = vsel %vm398, %v525, 0.0
        %v530 = vadd.f32 %v528, %v529
        %531 = vadd.xlane.f32.xlu0 %v530
        %v532 = vpop.xlane.xlu0 %531
        %v533 = vlaneseq
        %v534 = vshrl.u32 %v533, 7
        %v535 = vsub.s32 2, %v534
        %v536 = vrot.slane %v368, %v535
        %v537 = vlaneseq
        %v538 = vshrl.u32 %v537, 7
        %v539 = vsub.s32 6, %v538
        %v540 = vrot.slane %v368, %v539
        %vm543 = vcmask 1042434
        %v544 = vsel %vm543, %v536, 0.0
        %v545 = vsel %vm543, %v540, 0.0
        %v546 = vadd.f32 %v544, %v545
        %547 = vadd.xlane.f32.xlu0 %v546
        %v548 = vpop.xlane.xlu0 %547
        %vm549 = vcmp.eq.s32.totalorder %v319, 3
        %v550 = vcombine.high %v444, %v444
        %v552 = vsel %vm549, %v550, 0.0
        %v554 = vlaneseq
        %v555 = vshrl.u32 %v554, 7
        %v556 = vsub.s32 0, %v555
        %v557 = vrot.slane %v552, %v556
        %v558 = vlaneseq
        %v559 = vshrl.u32 %v558, 7
        %v560 = vsub.s32 1, %v559
        %v561 = vrot.slane %v552, %v560
        %v564 = vsel %vm398, %v557, 0.0
        %v565 = vsel %vm398, %v561, 0.0
        %v566 = vadd.f32 %v564, %v565
        %567 = vadd.xlane.f32.xlu0 %v566
        %v568 = vpop.xlane.xlu0 %567
        %v569 = vsel %vm549, 1.0, 0.0
        %v571 = vlaneseq
        %v572 = vshrl.u32 %v571, 7
        %v573 = vsub.s32 0, %v572
        %v574 = vrot.slane %v569, %v573
        %v575 = vlaneseq
        %v576 = vshrl.u32 %v575, 7
        %v577 = vsub.s32 1, %v576
        %v578 = vrot.slane %v569, %v577
        %v581 = vsel %vm398, %v574, 0.0
        %v582 = vsel %vm398, %v578, 0.0
        %v583 = vadd.f32 %v581, %v582
        %584 = vadd.xlane.f32.xlu0 %v583
        %v585 = vpop.xlane.xlu0 %584
        %v586 = vlaneseq
        %v587 = vshrl.u32 %v586, 7
        %v588 = vsub.s32 3, %v587
        %v589 = vrot.slane %v368, %v588
        %v590 = vlaneseq
        %v591 = vshrl.u32 %v590, 7
        %v592 = vsub.s32 7, %v591
        %v593 = vrot.slane %v368, %v592
        %vm596 = vcmask 1043459
        %v597 = vsel %vm596, %v589, 0.0
        %v598 = vsel %vm596, %v593, 0.0
        %v599 = vadd.f32 %v597, %v598
        %600 = vadd.xlane.f32.xlu0 %v599
        %v601 = vpop.xlane.xlu0 %600
        %v602 = vld [vmem:[%s293] sm:$0x1]
        %v603 = vlaneseq
        %v604 = vand.u32 %v603, 127
        %vm605 = vcmp.eq.s32.totalorder %v604, 0
        %v606 = vsel %vm605, %v403, 0.0
        %v607 = vadd.f32 %v606, 0.0
        %vm608 = vcmp.eq.s32.totalorder %v604, 1
        %v609 = vsel %vm608, %v462, 0.0
        %v610 = vadd.f32 %v607, %v609
        %vm611 = vcmp.eq.s32.totalorder %v604, 2
        %v612 = vsel %vm611, %v515, 0.0
        %v613 = vadd.f32 %v610, %v612
        %vm614 = vcmp.eq.s32.totalorder %v604, 3
        %v615 = vsel %vm614, %v568, 0.0
        %v616 = vadd.f32 %v613, %v615
        %v617 = vadd.f32 %v602, %v616
        %vm618 = vcmask 24576
        %619 = vst.msk [vmem:[%s293] sm:$0x1] %vm618, %v617
        %v620 = vld [vmem:[%s299] sm:$0x1]
        %v621 = vsel %vm605, %v435, 0.0
        %v622 = vadd.f32 %v621, 0.0
        %v623 = vsel %vm608, %v495, 0.0
        %v625 = vrot.slane %v623, 1
        %v627 = vadd.f32 %v622, %v625
        %v628 = vsel %vm611, %v548, 0.0
        %v630 = vrot.slane %v628, 2
        %v632 = vadd.f32 %v627, %v630
        %v633 = vsel %vm614, %v601, 0.0
        %v635 = vrot.slane %v633, 3
        %v637 = vadd.f32 %v632, %v635
        %v638 = vadd.f32 %v620, %v637
        %639 = vst.msk [vmem:[%s299] sm:$0x1] %vm618, %v638
        %v640 = vld [vmem:[%s305] sm:$0x1]
        %v641 = vsel %vm605, %v420, 0.0
        %v642 = vadd.f32 %v641, 0.0
        %v643 = vsel %vm608, %v479, 0.0
        %v644 = vadd.f32 %v642, %v643
        %v645 = vsel %vm611, %v532, 0.0
        %v646 = vadd.f32 %v644, %v645
        %v647 = vsel %vm614, %v585, 0.0
        %v648 = vadd.f32 %v646, %v647
        %v649 = vadd.f32 %v640, %v648
        %650 = vst.msk [vmem:[%s305] sm:$0x1] %vm618, %v649
        %s651 = sand.u32 %s117, 1
        %s652 = scalar_lea.sflag [#allocation4], %s651
        %s653 = sand.u32 %s117, 1
        %s654 = scalar_lea.vmem [#allocation7], %s653
        %s655 = sand.u32 %s28, 1
        %s656 = scalar_lea.sflag [#allocation9], %s655
        %s657 = sand.u32 %s145, 1
        %s658 = scalar_lea.vmem [#allocation8], %s657
        %s659 = sand.u32 %s28, 1
        %s660 = scalar_lea.sflag [#allocation9], %s659
        %s661 = sand.u32 %s173, 1
        %s662 = scalar_lea.vmem [#allocation10], %s661
        // Predicated region
        $region41: #{tpu_custom_call.1} parent=27 // pred_check
          %p663 = pneg %p127
        $region42: #{tpu_custom_call.1} parent=27 // pred_check_branch
          %665 = sbr.rel (%p663) target = $region44
        $region43: #{tpu_custom_call.1} parent=27 // pred_region
          %s667 = ssub.s32 16, 16
          %668 = vsyncadd %s652, %s667
          %s669 = smul.addr %s33, 2
          %s670 = sadd.s32 %s34, %s669
          %s671 = smul.addr %s670, 16
          %s672 = scalar_lea.hbm %s2, %s671
          %s674 = sshll.u32 %s654, 4
          %s675 = int_to_ptr.vmem [resolvable:$true] %s674
          %677 = dma.vmem_to_hbm [thread:$0]  %s675, 16, %s672, %s652
        $region44: #{tpu_custom_call.1} parent=27 // pred_fallthru
          _
        // Predicated region
        $region45: #{tpu_custom_call.1} parent=27 // pred_check
          %p678 = pneg %p155
        $region46: #{tpu_custom_call.1} parent=27 // pred_check_branch
          %680 = sbr.rel (%p678) target = $region48
        $region47: #{tpu_custom_call.1} parent=27 // pred_region
          %s682 = ssub.s32 16, 16
          %683 = vsyncadd %s656, %s682
          %s684 = smul.addr %s33, 2
          %s685 = sadd.s32 %s34, %s684
          %s686 = smul.addr %s685, 16
          %s687 = scalar_lea.hbm %s3, %s686
          %s689 = sshll.u32 %s658, 4
          %s690 = int_to_ptr.vmem [resolvable:$true] %s689
          %692 = dma.vmem_to_hbm [thread:$0]  %s690, 16, %s687, %s656
        $region48: #{tpu_custom_call.1} parent=27 // pred_fallthru
          _
        // Predicated region
        $region49: #{tpu_custom_call.1} parent=27 // pred_check
          %p693 = pneg %p183
        $region50: #{tpu_custom_call.1} parent=27 // pred_check_branch
          %695 = sbr.rel (%p693) target = $region52
        $region51: #{tpu_custom_call.1} parent=27 // pred_region
          %s697 = ssub.s32 16, 16
          %698 = vsyncadd %s660, %s697
          %s699 = smul.addr %s33, 2
          %s700 = sadd.s32 %s34, %s699
          %s701 = smul.addr %s700, 16
          %s702 = scalar_lea.hbm %s4, %s701
          %s704 = sshll.u32 %s662, 4
          %s705 = int_to_ptr.vmem [resolvable:$true] %s704
          %707 = dma.vmem_to_hbm [thread:$0]  %s705, 16, %s702, %s660
        $region52: #{tpu_custom_call.1} parent=27 // pred_fallthru
          _
      $region28: #{tpu_custom_call.1} parent=5 // pred_fallthru
        _
      %p708 = scmp.le.s32.totalorder 2, %s23
      // Predicated region
      $region53: #{tpu_custom_call.1} parent=5 // pred_check
        %p709 = pneg %p708
      $region54: #{tpu_custom_call.1} parent=5 // pred_check_branch
        %711 = sbr.rel (%p709) target = $region56
      $region55: #{tpu_custom_call.1} parent=5 // pred_region
        %s712 = ssub.s32 %s23, 2
        // Predicated region
        $region57: #{tpu_custom_call.1} parent=55 // pred_check
          %p713 = pneg %p133
        $region58: #{tpu_custom_call.1} parent=55 // pred_check_branch
          %715 = sbr.rel (%p713) target = $region60
        $region59: #{tpu_custom_call.1} parent=55 // pred_region
          %s716 = sand.u32 %s118, 1
          %s717 = scalar_lea.sflag [#allocation4], %s716
          %s718 = sand.u32 %s118, 1
          %s719 = scalar_lea.vmem [#allocation7], %s718
          %720 = dma.done %s717, 16
        $region60: #{tpu_custom_call.1} parent=55 // pred_fallthru
          _
        // Predicated region
        $region61: #{tpu_custom_call.1} parent=55 // pred_check
          %p721 = pneg %p161
        $region62: #{tpu_custom_call.1} parent=55 // pred_check_branch
          %723 = sbr.rel (%p721) target = $region64
        $region63: #{tpu_custom_call.1} parent=55 // pred_region
          %s724 = sand.u32 %s29, 1
          %s725 = scalar_lea.sflag [#allocation9], %s724
          %s726 = sand.u32 %s146, 1
          %s727 = scalar_lea.vmem [#allocation8], %s726
          %728 = dma.done %s725, 16
        $region64: #{tpu_custom_call.1} parent=55 // pred_fallthru
          _
        // Predicated region
        $region65: #{tpu_custom_call.1} parent=55 // pred_check
          %p729 = pneg %p189
        $region66: #{tpu_custom_call.1} parent=55 // pred_check_branch
          %731 = sbr.rel (%p729) target = $region68
        $region67: #{tpu_custom_call.1} parent=55 // pred_region
          %s732 = sand.u32 %s29, 1
          %s733 = scalar_lea.sflag [#allocation9], %s732
          %s734 = sand.u32 %s174, 1
          %s735 = scalar_lea.vmem [#allocation10], %s734
          %736 = dma.done %s733, 16
        $region68: #{tpu_custom_call.1} parent=55 // pred_fallthru
          _
      $region56: #{tpu_custom_call.1} parent=5 // pred_fallthru
        _
    $region6: #{tpu_custom_call.1} parent=1 // loop_footer
      %s27 = sadd.s32 1, %s23
    $region7: #{tpu_custom_call.1} parent=1 // loop_footer_branch
      %22 = sbr.rel target = $region3
    $region8: #{tpu_custom_call.1} parent=1 // loop_exit
      _
    %737 = vsyncpa [#allocation3], 1
    %s738 = scalar_lea.sflag [#allocation3], 1
    %739 = vsyncpa %s738, 1
    %740 = vsyncpa [#allocation6], 1
    %s741 = scalar_lea.sflag [#allocation6], 1
    %742 = vsyncpa %s741, 1
    %743 = vsyncpa [#allocation4], 1
    %s744 = scalar_lea.sflag [#allocation4], 1
    %745 = vsyncpa %s744, 1
    %746 = vsyncpa [#allocation9], 1
    %s747 = scalar_lea.sflag [#allocation9], 1
    %748 = vsyncpa %s747, 1

</llo_original>
